<compile_context>
chip_gen: v5e
topology: v5e:2x2
jax: 0.10.0
libtpu: 0.0.40
codegen_flags: <defaults>
</compile_context>

<pallas_src>
import functools

import jax
import jax.numpy as jnp
from jax.experimental import pallas as pl
from jax.experimental.pallas import tpu as pltpu


LANE = 128          # TPU lane width (feature dims padded to this)
ROW_ALIGN = 32      # dst-row alignment (int8 native tile is (32, 128))
TM_MAX = 256        # max dst-tile rows
TK_MAX = 2048       # max src reduction tile (large tiles -> near HBM roofline)


def _round_up(x, m):
    return ((x + m - 1) // m) * m


def _ceil_div(a, b):
    return -(-a // b)


def _choose_tile(n, t_max, align):
    """Smallest aligned tile covering n in ceil(n / t_max) tiles (minimizes padding)."""
    n = max(int(n), 1)
    num_tiles = _ceil_div(n, t_max)
    return _round_up(_ceil_div(n, num_tiles), align)


def _pad2d(arr, rows, cols, dtype):
    r, c = arr.shape
    return jnp.zeros((rows, cols), dtype).at[:r, :c].set(arr.astype(dtype))


# ----------------------------- Pallas kernel -------------------------------


def _sage_conv_kernel(a_ref, invdeg_ref, x_ref, xt_ref, wl_ref, wr_ref, b_ref,
                      o_ref, acc_ref, *, tk, apply_relu):
    k = pl.program_id(1)

    @pl.when(k == 0)
    def _init():
        acc_ref[...] = jnp.zeros_like(acc_ref)

    # int8 edge-count tile -> bf16 on the VPU (halves the dominant HBM stream);
    # source features are VMEM-resident, slice the current reduction window.
    a_tile = a_ref[...].astype(jnp.bfloat16)
    start = pl.multiple_of(k * tk, tk)
    x_tile = x_ref[pl.ds(start, tk), :]
    acc_ref[...] += jnp.dot(a_tile, x_tile, preferred_element_type=jnp.float32)

    @pl.when(k == pl.num_programs(1) - 1)
    def _finalize():
        # exact f32 mean normalization, then the two SAGEConv projections on the MXU
        aggr = (acc_ref[...] * invdeg_ref[...]).astype(wl_ref.dtype)
        out = jnp.dot(aggr, wl_ref[...], preferred_element_type=jnp.float32)
        out = out + jnp.dot(xt_ref[...], wr_ref[...], preferred_element_type=jnp.float32)
        out = out + b_ref[...]
        if apply_relu:
            out = jnp.maximum(out, 0.0)
        o_ref[...] = out.astype(o_ref.dtype)


def sage_conv_pallas(edge_index, n_src, n_dst, x_pad, w_l, b_l, w_r, *,
                     apply_relu, out_dtype=jnp.float32):
    """One SAGEConv layer over a sampled bipartite graph.

       edge_index [2, E]   row 0 = src index (< n_src), row 1 = dst index (< n_dst)
       x_pad      [>=n_src, f_in_p]  bf16 source features, feature dim padded to LANE.
                  Rows past n_src may hold arbitrary finite values; they only ever
                  meet zero adjacency-mask columns.
       w_l, w_r   [f_in, f_out]  (already transposed vs torch.nn.Linear.weight)
       b_l        [1, f_out]
       Returns the padded output [n_dst_p, f_out_p]; caller slices logical rows/cols.
    """
    f_in, f_out = w_l.shape
    f_in_p = _round_up(f_in, LANE)
    f_out_p = _round_up(f_out, LANE)
    assert x_pad.shape[1] == f_in_p and x_pad.shape[0] >= n_src

    tm = _choose_tile(n_dst, TM_MAX, ROW_ALIGN)
    # v7x has 2 TensorCores: give the "parallel" dst axis >= 2 blocks when possible.
    if _round_up(n_dst, tm) // tm < 2 and tm > ROW_ALIGN:
        tm = max(_round_up(_ceil_div(n_dst, 2), ROW_ALIGN), ROW_ALIGN)
    tk = _choose_tile(n_src, TK_MAX, LANE)
    n_dst_p = _round_up(n_dst, tm)
    n_src_p = _round_up(n_src, tk)

    # --- adjacency built directly at padded shape: int8 counts + f32 inverse degree ---
    src, dst = edge_index[0], edge_index[1]
    counts = jnp.zeros((n_dst_p, n_src_p), jnp.float32).at[dst, src].add(1.0)
    inv_deg = 1.0 / jnp.maximum(counts.sum(axis=1, keepdims=True), 1.0)   # [n_dst_p, 1]
    # TODO(synk): >127 duplicate edges for one (dst, src) pair would overflow int8.
    a_mask = counts.astype(jnp.int8)

    # --- operands in streaming dtypes / padded shapes ---
    rows = x_pad.shape[0]
    if rows < n_src_p:
        x_src = jnp.pad(x_pad, ((0, n_src_p - rows), (0, 0)))
    elif rows > n_src_p:
        x_src = x_pad[:n_src_p]
    else:
        x_src = x_pad
    xt_pad = jnp.zeros((n_dst_p, f_in_p), jnp.bfloat16).at[:n_dst].set(x_pad[:n_dst])
    w_l_p = _pad2d(w_l, f_in_p, f_out_p, jnp.bfloat16)
    w_r_p = _pad2d(w_r, f_in_p, f_out_p, jnp.bfloat16)
    b_p = jnp.zeros((1, f_out_p), jnp.float32).at[:, :f_out].set(b_l)

    grid = (n_dst_p // tm, n_src_p // tk)
    kernel = functools.partial(_sage_conv_kernel, tk=tk, apply_relu=apply_relu)

    out_bytes = jnp.dtype(out_dtype).itemsize
    # VMEM budget derived from the actual tile footprint (double-buffered) + headroom.
    vmem_bytes = (2 * tm * tk                       # A tile, int8
                  + 2 * n_src_p * f_in_p * 2        # resident x, bf16
                  + 2 * tm * f_in_p * 2             # x_target
                  + 2 * 2 * f_in_p * f_out_p * 2    # W_l, W_r
                  + 2 * f_out_p * 4 + 2 * tm * 4    # bias, inv-degree
                  + 2 * tm * f_out_p * out_bytes    # output tile
                  + tm * f_in_p * 4                 # accumulator scratch
                  + (2 << 20))                      # headroom
    vmem_limit = int(min(max(vmem_bytes, 8 << 20), 64 << 20))

    cost = pl.CostEstimate(
        flops=2 * n_dst_p * n_src_p * f_in_p + 4 * n_dst_p * f_in_p * f_out_p,
        transcendentals=0,
        bytes_accessed=(n_dst_p * n_src_p                      # A int8
                        + n_src_p * f_in_p * 2                 # x bf16
                        + n_dst_p * f_in_p * 2                 # x_target bf16
                        + 2 * f_in_p * f_out_p * 2             # weights
                        + n_dst_p * 4 + f_out_p * 4            # inv_deg, bias
                        + n_dst_p * f_out_p * out_bytes))      # output

    return pl.pallas_call(
        kernel,
        out_shape=jax.ShapeDtypeStruct((n_dst_p, f_out_p), out_dtype),
        grid_spec=pltpu.PrefetchScalarGridSpec(
            num_scalar_prefetch=0,
            grid=grid,
            in_specs=[
                pl.BlockSpec((tm, tk), lambda i, k: (i, k)),            # A int8 tile
                pl.BlockSpec((tm, 1), lambda i, k: (i, 0)),             # inv-degree (f32)
                pl.BlockSpec((n_src_p, f_in_p), lambda i, k: (0, 0)),   # x (VMEM-resident)
                pl.BlockSpec((tm, f_in_p), lambda i, k: (i, 0)),        # x_target
                pl.BlockSpec((f_in_p, f_out_p), lambda i, k: (0, 0)),   # W_l (resident)
                pl.BlockSpec((f_in_p, f_out_p), lambda i, k: (0, 0)),   # W_r (resident)
                pl.BlockSpec((1, f_out_p), lambda i, k: (0, 0)),        # bias (resident)
            ],
            out_specs=pl.BlockSpec((tm, f_out_p), lambda i, k: (i, 0)),
            scratch_shapes=[pltpu.VMEM((tm, f_in_p), jnp.float32)],
        ),
        compiler_params=pltpu.CompilerParams(
            dimension_semantics=("parallel", "arbitrary"),
            vmem_limit_bytes=vmem_limit,
        ),
        cost_estimate=cost,
    )(a_mask, inv_deg, x_src, xt_pad, w_l_p, w_r_p, b_p)


# --------------------------- plain-JAX glue ---------------------------------


def init_sage_params(key, input_shape, layer_dims, output_shape):
    all_dims = [input_shape] + list(layer_dims) + [output_shape]
    params = []
    for i in range(len(all_dims) - 1):
        f_in, f_out = all_dims[i], all_dims[i + 1]
        key, k1, k2, k3 = jax.random.split(key, 4)
        scale = 1.0 / jnp.sqrt(jnp.float32(f_in))
        w_l = jax.random.uniform(k1, (f_in, f_out), jnp.float32, -scale, scale)
        b_l = jax.random.uniform(k2, (1, f_out), jnp.float32, -scale, scale)
        w_r = jax.random.uniform(k3, (f_in, f_out), jnp.float32, -scale, scale)
        params.append((w_l, b_l, w_r))
    return params


def sage_forward(x, adjs, params, return_penultimate=False):
    """adjs: list of (edge_index, size) with size = (num_src, num_dst), mirroring
    NeighborSampler's (edge_index, e_id, size) tuples.  F.dropout: eval -> identity."""
    num_layers = len(params)
    f_in = params[0][0].shape[0]
    f_in_p = _round_up(f_in, LANE)
    # Pad input features once; hidden activations stay in padded bf16 layout.
    x_pad = jnp.zeros((x.shape[0], f_in_p), jnp.bfloat16).at[:, :f_in].set(
        x.astype(jnp.bfloat16))
    penultimate = None
    out_final = None
    for i, (edge_index, size) in enumerate(adjs):
        n_src, n_dst = size
        w_l, b_l, w_r = params[i]
        is_last = (i == num_layers - 1)
        if return_penultimate and is_last:
            penultimate = x_pad[:n_dst, :w_l.shape[0]]
        out_p = sage_conv_pallas(
            edge_index, n_src, n_dst, x_pad, w_l, b_l, w_r,
            apply_relu=not is_last,
            out_dtype=jnp.float32 if is_last else jnp.bfloat16)
        if is_last:
            out_final = out_p[:n_dst, :w_l.shape[1]]
        else:
            # Keep the padded bf16 layout; garbage in padded rows only ever meets
            # zero adjacency columns in the next layer.
            x_pad = out_p
    if return_penultimate:
        return out_final, penultimate
    return out_final


def sage_forward_reference(x, adjs, params):
    """Pure-jnp reference emulating the kernel numerics (bf16 streams, f32 accumulate,
    exact f32 inverse-degree normalization)."""
    num_layers = len(params)
    xb = x.astype(jnp.bfloat16)
    out = None
    for i, (edge_index, size) in enumerate(adjs):
        n_src, n_dst = size
        src, dst = edge_index[0], edge_index[1]
        counts = jnp.zeros((n_dst, n_src), jnp.float32).at[dst, src].add(1.0)
        inv_deg = 1.0 / jnp.maximum(counts.sum(axis=1, keepdims=True), 1.0)
        w_l, b_l, w_r = params[i]
        aggr = (jnp.dot(counts.astype(jnp.bfloat16), xb[:n_src],
                        preferred_element_type=jnp.float32) * inv_deg
                ).astype(jnp.bfloat16)
        xt = xb[:n_dst]
        out = (jnp.dot(aggr, w_l.astype(jnp.bfloat16), preferred_element_type=jnp.float32)
               + jnp.dot(xt, w_r.astype(jnp.bfloat16), preferred_element_type=jnp.float32)
               + b_l)
        if i != num_layers - 1:
            out = jnp.maximum(out, 0.0)
            xb = out.astype(jnp.bfloat16)
    return out


def make_random_graph(key, node_counts, edges_per_layer, f_in):
    key, xkey = jax.random.split(key)
    x0 = jax.random.normal(xkey, (node_counts[0], f_in), jnp.float32)
    adjs = []
    for i in range(len(node_counts) - 1):
        n_src, n_dst = node_counts[i], node_counts[i + 1]
        key, ks, kd = jax.random.split(key, 3)
        src = jax.random.randint(ks, (edges_per_layer[i],), 0, n_src)
        dst = jax.random.randint(kd, (edges_per_layer[i],), 0, n_dst)
        edge_index = jnp.stack([src, dst], axis=0)   # [2, E], row0=src, row1=dst
        adjs.append((edge_index, (n_src, n_dst)))
    return x0, adjs


# ------------------------------- main ---------------------------------------


if __name__ == "__main__":
    key = jax.random.PRNGKey(0)

    # Model config: SAGE(input_shape=32, layer_dims=[32], output_shape=16, dropout=0.5)
    input_shape, layer_dims, output_shape = 32, [32], 16
    key, pkey = jax.random.split(key)
    params = init_sage_params(pkey, input_shape, layer_dims, output_shape)

    # --- small config matching the module example (single-tile grid) ---
    node_counts = [16, 12, 8]
    key, gkey = jax.random.split(key)
    x0, adjs = make_random_graph(gkey, node_counts, [40, 40], input_shape)

    out = jax.block_until_ready(sage_forward(x0, adjs, params))
    ref = jax.block_until_ready(sage_forward_reference(x0, adjs, params))
    assert out.shape == (node_counts[-1], output_shape), out.shape
    assert jnp.allclose(out, ref, atol=3e-2, rtol=3e-2), "mismatch vs reference (small)"

    # --- larger config exercising the multi-tile grid (dst tiles + k reduction tiles,
    #     and the >=2-dst-block split for the last layer) ---
    big_counts = [1536, 640, 256]
    key, gkey2 = jax.random.split(key)
    xb, adjs_b = make_random_graph(gkey2, big_counts, [12800, 2560], input_shape)

    out_b = jax.block_until_ready(sage_forward(xb, adjs_b, params))
    ref_b = jax.block_until_ready(sage_forward_reference(xb, adjs_b, params))
    assert out_b.shape == (big_counts[-1], output_shape), out_b.shape
    assert jnp.allclose(out_b, ref_b, atol=3e-2, rtol=3e-2), "mismatch vs reference (tiled)"

    print("KERNEL_OK")
</pallas_src>

<mosaic_0001>
module attributes {stable_mosaic.version = 11 : i64} {
  func.func @_sage_conv_kernel(%arg0: i32, %arg1: i32, %arg2: memref<32x128xi8, #tpu.memory_space<vmem>>, %arg3: memref<32x1xf32, #tpu.memory_space<vmem>>, %arg4: memref<128x128xbf16, #tpu.memory_space<vmem>>, %arg5: memref<32x128xbf16, #tpu.memory_space<vmem>>, %arg6: memref<128x128xbf16, #tpu.memory_space<vmem>>, %arg7: memref<128x128xbf16, #tpu.memory_space<vmem>>, %arg8: memref<1x128xf32, #tpu.memory_space<vmem>>, %arg9: memref<32x128xbf16, #tpu.memory_space<vmem>>, %arg10: memref<32x128xf32, #tpu.memory_space<vmem>>) attributes {dimension_semantics = [#tpu.dimension_semantics<parallel>, #tpu.dimension_semantics<arbitrary>], iteration_bounds = array<i64: 1, 1>, scalar_prefetch = 0 : i64, scratch_operands = 1 : i64, tpu.core_type = #tpu.core_type<tc>, window_params = [{transform_indices = @transform_0, window_bounds = array<i64: 32, 128>}, {transform_indices = @transform_1, window_bounds = array<i64: 32, 1>}, {pipeline_mode = #tpu.pipeline_mode<synchronous>, transform_indices = @transform_2, window_bounds = array<i64: 128, 128>}, {transform_indices = @transform_3, window_bounds = array<i64: 32, 128>}, {pipeline_mode = #tpu.pipeline_mode<synchronous>, transform_indices = @transform_4, window_bounds = array<i64: 128, 128>}, {pipeline_mode = #tpu.pipeline_mode<synchronous>, transform_indices = @transform_5, window_bounds = array<i64: 128, 128>}, {pipeline_mode = #tpu.pipeline_mode<synchronous>, transform_indices = @transform_6, window_bounds = array<i64: 1, 128>}, {transform_indices = @transform_7, window_bounds = array<i64: 32, 128>}]} {
    %c0_i32 = arith.constant 0 : i32
    %0 = arith.cmpi eq, %arg1, %c0_i32 : i32
    %1 = arith.extui %0 : i1 to i32
    %c0_i32_0 = arith.constant 0 : i32
    %2 = arith.cmpi ne, %1, %c0_i32_0 : i32
    scf.if %2 {
      %cst_9 = arith.constant 0.000000e+00 : f32
      %16 = vector.broadcast %cst_9 : f32 to vector<32x128xf32>
      %c0_10 = arith.constant 0 : index
      %c0_11 = arith.constant 0 : index
      %17 = vector.load %arg10[%c0_10, %c0_11] : memref<32x128xf32, #tpu.memory_space<vmem>>, vector<32x128xf32>
      tpu.vector_store %arg10[%c0_10, %c0_11], %16 {strides = array<i32>} : memref<32x128xf32, #tpu.memory_space<vmem>>, vector<32x128xf32>,
    } else {
    }
    %c0 = arith.constant 0 : index
    %c0_1 = arith.constant 0 : index
    %3 = vector.load %arg2[%c0, %c0_1] : memref<32x128xi8, #tpu.memory_space<vmem>>, vector<32x128xi8>
    %4 = arith.sitofp %3 : vector<32x128xi8> to vector<32x128xbf16>
    %c128_i32 = arith.constant 128 : i32
    %5 = arith.muli %arg1, %c128_i32 : i32
    %6 = tpu.assume_multiple %5, 128 : i32
    %7 = arith.index_cast %6 : i32 to index
    %c0_2 = arith.constant 0 : index
    %8 = vector.load %arg4[%7, %c0_2] : memref<128x128xbf16, #tpu.memory_space<vmem>>, vector<128x128xbf16>
    %c0_3 = arith.constant 0 : index
    %c0_4 = arith.constant 0 : index
    %9 = vector.load %arg10[%c0_3, %c0_4] : memref<32x128xf32, #tpu.memory_space<vmem>>, vector<32x128xf32>
    %cst = arith.constant dense<0.000000e+00> : vector<32x128xf32>
    %10 = tpu.matmul %4, %8, %cst {dimension_numbers = #tpu.dot_dimension_numbers<[1], [0], [0], [1], [0, 0, 1, 1], [], []>} : vector<32x128xbf16>, vector<128x128xbf16>, vector<32x128xf32> -> vector<32x128xf32>
    %11 = arith.addf %9, %10 : vector<32x128xf32>
    %c0_5 = arith.constant 0 : index
    %c0_6 = arith.constant 0 : index
    %12 = vector.load %arg10[%c0_5, %c0_6] : memref<32x128xf32, #tpu.memory_space<vmem>>, vector<32x128xf32>
    tpu.vector_store %arg10[%c0_5, %c0_6], %11 {strides = array<i32>} : memref<32x128xf32, #tpu.memory_space<vmem>>, vector<32x128xf32>,
    %c0_i32_7 = arith.constant 0 : i32
    %13 = arith.cmpi eq, %arg1, %c0_i32_7 : i32
    %14 = arith.extui %13 : i1 to i32
    %c0_i32_8 = arith.constant 0 : i32
    %15 = arith.cmpi ne, %14, %c0_i32_8 : i32
    scf.if %15 {
      %c0_9 = arith.constant 0 : index
      %c0_10 = arith.constant 0 : index
      %16 = vector.load %arg10[%c0_9, %c0_10] : memref<32x128xf32, #tpu.memory_space<vmem>>, vector<32x128xf32>
      %c0_11 = arith.constant 0 : index
      %c0_12 = arith.constant 0 : index
      %17 = vector.load %arg3[%c0_11, %c0_12] : memref<32x1xf32, #tpu.memory_space<vmem>>, vector<32x1xf32>
      %18 = vector.broadcast %17 : vector<32x1xf32> to vector<32x128xf32>
      %19 = arith.mulf %16, %18 : vector<32x128xf32>
      %20 = arith.truncf %19 : vector<32x128xf32> to vector<32x128xbf16>
      %c0_13 = arith.constant 0 : index
      %c0_14 = arith.constant 0 : index
      %21 = vector.load %arg6[%c0_13, %c0_14] : memref<128x128xbf16, #tpu.memory_space<vmem>>, vector<128x128xbf16>
      %cst_15 = arith.constant dense<0.000000e+00> : vector<32x128xf32>
      %22 = tpu.matmul %20, %21, %cst_15 {dimension_numbers = #tpu.dot_dimension_numbers<[1], [0], [0], [1], [0, 0, 1, 1], [], []>} : vector<32x128xbf16>, vector<128x128xbf16>, vector<32x128xf32> -> vector<32x128xf32>
      %c0_16 = arith.constant 0 : index
      %c0_17 = arith.constant 0 : index
      %23 = vector.load %arg5[%c0_16, %c0_17] : memref<32x128xbf16, #tpu.memory_space<vmem>>, vector<32x128xbf16>
      %c0_18 = arith.constant 0 : index
      %c0_19 = arith.constant 0 : index
      %24 = vector.load %arg7[%c0_18, %c0_19] : memref<128x128xbf16, #tpu.memory_space<vmem>>, vector<128x128xbf16>
      %cst_20 = arith.constant dense<0.000000e+00> : vector<32x128xf32>
      %25 = tpu.matmul %23, %24, %cst_20 {dimension_numbers = #tpu.dot_dimension_numbers<[1], [0], [0], [1], [0, 0, 1, 1], [], []>} : vector<32x128xbf16>, vector<128x128xbf16>, vector<32x128xf32> -> vector<32x128xf32>
      %26 = arith.addf %22, %25 : vector<32x128xf32>
      %c0_21 = arith.constant 0 : index
      %c0_22 = arith.constant 0 : index
      %27 = vector.load %arg8[%c0_21, %c0_22] : memref<1x128xf32, #tpu.memory_space<vmem>>, vector<1x128xf32>
      %28 = vector.broadcast %27 : vector<1x128xf32> to vector<32x128xf32>
      %29 = arith.addf %26, %28 : vector<32x128xf32>
      %cst_23 = arith.constant 0.000000e+00 : f32
      %30 = vector.broadcast %cst_23 : f32 to vector<32x128xf32>
      %31 = arith.maximumf %29, %30 : vector<32x128xf32>
      %32 = arith.truncf %31 : vector<32x128xf32> to vector<32x128xbf16>
      %c0_24 = arith.constant 0 : index
      %c0_25 = arith.constant 0 : index
      %33 = vector.load %arg9[%c0_24, %c0_25] : memref<32x128xbf16, #tpu.memory_space<vmem>>, vector<32x128xbf16>
      tpu.vector_store %arg9[%c0_24, %c0_25], %32 {strides = array<i32>} : memref<32x128xbf16, #tpu.memory_space<vmem>>, vector<32x128xbf16>,
    } else {
    }
    return
  }
  func.func @transform_0(%arg0: i32, %arg1: i32) -> (i32, i32) {
    %c0_i32 = arith.constant 0 : i32
    return %arg0, %arg1 : i32, i32
  }
  func.func @transform_1(%arg0: i32, %arg1: i32) -> (i32, i32) {
    %c0_i32 = arith.constant 0 : i32
    %c0_i32_0 = arith.constant 0 : i32
    return %arg0, %c0_i32 : i32, i32
  }
  func.func @transform_2(%arg0: i32, %arg1: i32) -> (i32, i32) {
    %c0_i32 = arith.constant 0 : i32
    %c0_i32_0 = arith.constant 0 : i32
    %c0_i32_1 = arith.constant 0 : i32
    return %c0_i32, %c0_i32_0 : i32, i32
  }
  func.func @transform_3(%arg0: i32, %arg1: i32) -> (i32, i32) {
    %c0_i32 = arith.constant 0 : i32
    %c0_i32_0 = arith.constant 0 : i32
    return %arg0, %c0_i32 : i32, i32
  }
  func.func @transform_4(%arg0: i32, %arg1: i32) -> (i32, i32) {
    %c0_i32 = arith.constant 0 : i32
    %c0_i32_0 = arith.constant 0 : i32
    %c0_i32_1 = arith.constant 0 : i32
    return %c0_i32, %c0_i32_0 : i32, i32
  }
  func.func @transform_5(%arg0: i32, %arg1: i32) -> (i32, i32) {
    %c0_i32 = arith.constant 0 : i32
    %c0_i32_0 = arith.constant 0 : i32
    %c0_i32_1 = arith.constant 0 : i32
    return %c0_i32, %c0_i32_0 : i32, i32
  }
  func.func @transform_6(%arg0: i32, %arg1: i32) -> (i32, i32) {
    %c0_i32 = arith.constant 0 : i32
    %c0_i32_0 = arith.constant 0 : i32
    %c0_i32_1 = arith.constant 0 : i32
    return %c0_i32, %c0_i32_0 : i32, i32
  }
  func.func @transform_7(%arg0: i32, %arg1: i32) -> (i32, i32) {
    %c0_i32 = arith.constant 0 : i32
    %c0_i32_0 = arith.constant 0 : i32
    return %arg0, %c0_i32 : i32, i32
  }
}

</mosaic_0001>

<llo_original>
// kernel: tpu_custom_call.1
$region0: #{tpu_custom_call.1}
  #allocation0 [shape = 'u32[]', space=smem, size = 0x4, offset = 0x4, fixed_abs, tag = 'smem constant byte address 0x4 - core index']
  #allocation1 [shape = 'u32[72,128]{1,0:T(1,128)}', space=vmem, size = 0x9000, scoped, tag = 'internal scratch']
  #allocation2 [shape = 'f32[32,128]{1,0:T(8,128)}', space=vmem, size = 0x4000, scoped, tag = 'scratch operand']
  %s0 = inlined_call_operand.vmem [shape: s8[32,128], index: 0, kind: input, shape index: {}]
  %s1 = inlined_call_operand.vmem [shape: f32[32,1], index: 1, kind: input, shape index: {}]
  %s2 = inlined_call_operand.hbm [shape: bf16[128,128], index: 2, kind: input, shape index: {}]
  %s3 = inlined_call_operand.vmem [shape: bf16[32,128], index: 3, kind: input, shape index: {}]
  %s4 = inlined_call_operand.hbm [shape: bf16[128,128], index: 4, kind: input, shape index: {}]
  %s5 = inlined_call_operand.hbm [shape: bf16[128,128], index: 5, kind: input, shape index: {}]
  %s6 = inlined_call_operand.vmem [shape: f32[1,128], index: 6, kind: input, shape index: {}]
  %s7 = inlined_call_operand.hbm [shape: bf16[32,128], index: 7, kind: output, shape index: {}]
  %s8 = sld [smem:[#allocation0]]
  $region58: #{tpu_custom_call.1} parent=0
    _
  %s10 = ssub.s32 1, %s8
  %s11 = scalar_select 0, %s10, %s8
  $region1: #{tpu_custom_call.1} parent=0
    #allocation3 [shape = 'u8[32768]{0}', space=vmem, size = 0x8000, scoped, tag = 'input window, operand 2, single buffered']
    #allocation4 [shape = 's32[1]{0}', space=sflag, size = 0x4, scoped, tag = 'scoped memory for tpu_custom_call.1']
    #allocation5 [shape = 's32[1]{0}', space=sflag, size = 0x4, scoped, tag = 'scoped memory for tpu_custom_call.1']
    #allocation6 [shape = 'u8[32768]{0}', space=vmem, size = 0x8000, scoped, tag = 'input window, operand 4, single buffered']
    #allocation7 [shape = 's32[1]{0}', space=sflag, size = 0x4, scoped, tag = 'scoped memory for tpu_custom_call.1']
    #allocation8 [shape = 'u8[32768]{0}', space=vmem, size = 0x8000, scoped, tag = 'input window, operand 5, single buffered']
    #allocation9 [shape = 'u8[8192]{0}', space=vmem, size = 0x2000, scoped, tag = 'output window, operand 0, single buffered']
    %12 = vsyncpa [#allocation4], 0
    %13 = vsyncpa [#allocation7], 0
    %14 = vsyncpa [#allocation5], 0
    // Predicated region
    $region2: #{tpu_custom_call.1} parent=1 // pred_check
      _
    $region3: #{tpu_custom_call.1} parent=1 // pred_check_branch
      %16 = sbr.rel (0) target = $region5
    $region4: #{tpu_custom_call.1} parent=1 // pred_region
      _
    $region5: #{tpu_custom_call.1} parent=1 // pred_fallthru
      _
    // Predicated region
    $region6: #{tpu_custom_call.1} parent=1 // pred_check
      _
    $region7: #{tpu_custom_call.1} parent=1 // pred_check_branch
      %18 = sbr.rel (0) target = $region9
    $region8: #{tpu_custom_call.1} parent=1 // pred_region
      _
    $region9: #{tpu_custom_call.1} parent=1 // pred_fallthru
      _
    // Predicated region
    $region10: #{tpu_custom_call.1} parent=1 // pred_check
      _
    $region11: #{tpu_custom_call.1} parent=1 // pred_check_branch
      %20 = sbr.rel (0) target = $region13
    $region12: #{tpu_custom_call.1} parent=1 // pred_region
      %22 = vsyncadd [#allocation4], 0
      %s23 = sshll.u32 %s2, 4
      %s24 = int_to_ptr.hbm [resolvable:$true] %s23
      %s25 = sshll.u32 [#allocation3], 4
      %s26 = int_to_ptr.vmem [resolvable:$true] %s25
      %31 = dma.hbm_to_vmem [thread:$0]  %s24, 1024, %s26, [#allocation4], 64, 64, 4
    $region13: #{tpu_custom_call.1} parent=1 // pred_fallthru
      _
    // Predicated region
    $region14: #{tpu_custom_call.1} parent=1 // pred_check
      _
    $region15: #{tpu_custom_call.1} parent=1 // pred_check_branch
      %33 = sbr.rel (0) target = $region17
    $region16: #{tpu_custom_call.1} parent=1 // pred_region
      _
    $region17: #{tpu_custom_call.1} parent=1 // pred_fallthru
      _
    // Predicated region
    $region18: #{tpu_custom_call.1} parent=1 // pred_check
      _
    $region19: #{tpu_custom_call.1} parent=1 // pred_check_branch
      %35 = sbr.rel (0) target = $region21
    $region20: #{tpu_custom_call.1} parent=1 // pred_region
      %37 = vsyncadd [#allocation7], 0
      %s38 = sshll.u32 %s4, 4
      %s39 = int_to_ptr.hbm [resolvable:$true] %s38
      %s40 = sshll.u32 [#allocation6], 4
      %s41 = int_to_ptr.vmem [resolvable:$true] %s40
      %46 = dma.hbm_to_vmem [thread:$0]  %s39, 1024, %s41, [#allocation7], 64, 64, 4
    $region21: #{tpu_custom_call.1} parent=1 // pred_fallthru
      _
    // Predicated region
    $region22: #{tpu_custom_call.1} parent=1 // pred_check
      _
    $region23: #{tpu_custom_call.1} parent=1 // pred_check_branch
      %48 = sbr.rel (0) target = $region25
    $region24: #{tpu_custom_call.1} parent=1 // pred_region
      %50 = vsyncadd [#allocation7], 0
      %s51 = sshll.u32 %s5, 4
      %s52 = int_to_ptr.hbm [resolvable:$true] %s51
      %s53 = sshll.u32 [#allocation8], 4
      %s54 = int_to_ptr.vmem [resolvable:$true] %s53
      %59 = dma.hbm_to_vmem [thread:$0]  %s52, 1024, %s54, [#allocation7], 64, 64, 4
    $region25: #{tpu_custom_call.1} parent=1 // pred_fallthru
      _
    // Predicated region
    $region26: #{tpu_custom_call.1} parent=1 // pred_check
      _
    $region27: #{tpu_custom_call.1} parent=1 // pred_check_branch
      %61 = sbr.rel (0) target = $region29
    $region28: #{tpu_custom_call.1} parent=1 // pred_region
      _
    $region29: #{tpu_custom_call.1} parent=1 // pred_fallthru
      _
    // Predicated region
    $region30: #{tpu_custom_call.1} parent=1 // pred_check
      _
    $region31: #{tpu_custom_call.1} parent=1 // pred_check_branch
      %63 = sbr.rel (0) target = $region33
    $region32: #{tpu_custom_call.1} parent=1 // pred_region
      %65 = dma.done [#allocation4], 1024
    $region33: #{tpu_custom_call.1} parent=1 // pred_fallthru
      _
    // Predicated region
    $region34: #{tpu_custom_call.1} parent=1 // pred_check
      _
    $region35: #{tpu_custom_call.1} parent=1 // pred_check_branch
      %67 = sbr.rel (0) target = $region37
    $region36: #{tpu_custom_call.1} parent=1 // pred_region
      %69 = dma.done [#allocation7], 1024
    $region37: #{tpu_custom_call.1} parent=1 // pred_fallthru
      _
    // Predicated region
    $region38: #{tpu_custom_call.1} parent=1 // pred_check
      _
    $region39: #{tpu_custom_call.1} parent=1 // pred_check_branch
      %71 = sbr.rel (0) target = $region41
    $region40: #{tpu_custom_call.1} parent=1 // pred_region
      %73 = dma.done [#allocation7], 1024
    $region41: #{tpu_custom_call.1} parent=1 // pred_fallthru
      _
    %p74 = scmp.eq.s32.totalorder 0, 0
    // Predicated region
    $region42: #{tpu_custom_call.1} parent=1 // pred_check
      %p75 = pneg %p74
    $region43: #{tpu_custom_call.1} parent=1 // pred_check_branch
      %77 = sbr.rel (%p75) target = $region45
    $region44: #{tpu_custom_call.1} parent=1 // pred_region
      %78 = vst [vmem:[#allocation2] sm:$0xff] 0.0
      %79 = vst [vmem:[#allocation2 + $0x8] sm:$0xff] 0.0
      %80 = vst [vmem:[#allocation2 + $0x10] sm:$0xff] 0.0
      %81 = vst [vmem:[#allocation2 + $0x18] sm:$0xff] 0.0
    $region45: #{tpu_custom_call.1} parent=1 // pred_fallthru
      _
    %v82 = vld [vmem:[%s0] sm:$0xff]
    %v83 = vunpack.c.0.s8 %v82
    %v84 = vunpack.c.1.s8 %v82
    %v85 = vunpack.c.2.s8 %v82
    %v86 = vunpack.c.3.s8 %v82
    %v87 = vcvt.s32.f32 %v83
    %v88 = vcvt.s32.f32 %v84
    %v89 = vcvt.s32.f32 %v85
    %v90 = vcvt.s32.f32 %v86
    %v91 = vpack.c.bf16 %v88, %v87
    %v92 = vpack.c.bf16 %v90, %v89
    %s93 = smul.u32 0, 128
    %s94 = sshra.s32 %s93, 3
    %s95 = sand.u32 %s93, 7
    %s96 = smul.addr %s94, 4
    %s97 = scalar_lea.vmem [#allocation3], %s96
    %v98 = vld [vmem:[%s97] sm:$0xf]
    %v99 = vld [vmem:[%s97 + $0x4] sm:$0xf]
    %v100 = vld [vmem:[%s97 + $0x8] sm:$0xf]
    %v101 = vld [vmem:[%s97 + $0xc] sm:$0xf]
    %v102 = vld [vmem:[%s97 + $0x10] sm:$0xf]
    %v103 = vld [vmem:[%s97 + $0x14] sm:$0xf]
    %v104 = vld [vmem:[%s97 + $0x18] sm:$0xf]
    %v105 = vld [vmem:[%s97 + $0x1c] sm:$0xf]
    %v106 = vld [vmem:[%s97 + $0x20] sm:$0xf]
    %v107 = vld [vmem:[%s97 + $0x24] sm:$0xf]
    %v108 = vld [vmem:[%s97 + $0x28] sm:$0xf]
    %v109 = vld [vmem:[%s97 + $0x2c] sm:$0xf]
    %v110 = vld [vmem:[%s97 + $0x30] sm:$0xf]
    %v111 = vld [vmem:[%s97 + $0x34] sm:$0xf]
    %v112 = vld [vmem:[%s97 + $0x38] sm:$0xf]
    %v113 = vld [vmem:[%s97 + $0x3c] sm:$0xf]
    %v114 = vld [vmem:[#allocation2] sm:$0xff]
    %v115 = vld [vmem:[#allocation2 + $0x8] sm:$0xff]
    %v116 = vld [vmem:[#allocation2 + $0x10] sm:$0xff]
    %v117 = vld [vmem:[#allocation2 + $0x18] sm:$0xff]
    %v134 = vunpack.c.l.b16 %v98
    %v135 = vunpack.c.l.b16 %v99
    %v136 = vunpack.c.l.b16 %v100
    %v137 = vunpack.c.l.b16 %v101
    %v138 = vunpack.c.l.b16 %v102
    %v139 = vunpack.c.l.b16 %v103
    %v140 = vunpack.c.l.b16 %v104
    %v141 = vunpack.c.l.b16 %v105
    %v142 = vunpack.c.l.b16 %v106
    %v143 = vunpack.c.l.b16 %v107
    %v144 = vunpack.c.l.b16 %v108
    %v145 = vunpack.c.l.b16 %v109
    %v146 = vunpack.c.l.b16 %v110
    %v147 = vunpack.c.l.b16 %v111
    %v148 = vunpack.c.l.b16 %v112
    %v149 = vunpack.c.l.b16 %v113
    %v150 = vpack.c.b16 %v135, %v134
    %v151 = vpack.c.b16 %v137, %v136
    %v152 = vpack.c.b16 %v139, %v138
    %v153 = vpack.c.b16 %v141, %v140
    %v154 = vpack.c.b16 %v143, %v142
    %v155 = vpack.c.b16 %v145, %v144
    %v156 = vpack.c.b16 %v147, %v146
    %v157 = vpack.c.b16 %v149, %v148
    %166 = vmatpush.bf16.msra.mxu0 %v157
    %167 = vmatpush.bf16.msra.mxu0 %v156
    %168 = vmatpush.bf16.msra.mxu0 %v155
    %169 = vmatpush.bf16.msra.mxu0 %v154
    %170 = vmatpush.bf16.msra.mxu0 %v153
    %171 = vmatpush.bf16.msra.mxu0 %v152
    %172 = vmatpush.bf16.msra.mxu0 %v151
    %173 = vmatpush.bf16.msra.mxu0 %v150
    %174 = vmatmul.bf16.gmra.mxu0 %v91
    %v175 = vpop.f32.mrf.mxu0
    %v176 = vadd.f32 0.0, %v175
    %v177 = vpop.f32.mrf.mxu0
    %v178 = vadd.f32 0.0, %v177
    %179 = vmatmul.bf16.gmra.mxu0 %v92
    %v180 = vpop.f32.mrf.mxu0
    %v181 = vadd.f32 0.0, %v180
    %v182 = vpop.f32.mrf.mxu0
    %v183 = vadd.f32 0.0, %v182
    %184 = vdwg.mxu0
    %v185 = vadd.f32 %v114, %v176
    %v186 = vadd.f32 %v115, %v178
    %v187 = vadd.f32 %v116, %v181
    %v188 = vadd.f32 %v117, %v183
    %189 = vst [vmem:[#allocation2] sm:$0xff] %v185
    %190 = vst [vmem:[#allocation2 + $0x8] sm:$0xff] %v186
    %191 = vst [vmem:[#allocation2 + $0x10] sm:$0xff] %v187
    %192 = vst [vmem:[#allocation2 + $0x18] sm:$0xff] %v188
    // Predicated region
    $region46: #{tpu_custom_call.1} parent=1 // pred_check
      %p193 = pneg %p74
    $region47: #{tpu_custom_call.1} parent=1 // pred_check_branch
      %195 = sbr.rel (%p193) target = $region49
    $region48: #{tpu_custom_call.1} parent=1 // pred_region
      %v196 = vld [vmem:[#allocation2] sm:$0xff]
      %v197 = vld [vmem:[#allocation2 + $0x8] sm:$0xff]
      %v198 = vld [vmem:[#allocation2 + $0x10] sm:$0xff]
      %v199 = vld [vmem:[#allocation2 + $0x18] sm:$0xff]
      %v200 = vld [vmem:[%s1] sm:$0xff]
      %v201 = vld [vmem:[%s1 + $0x8] sm:$0xff]
      %v202 = vld [vmem:[%s1 + $0x10] sm:$0xff]
      %v203 = vld [vmem:[%s1 + $0x18] sm:$0xff]
      %205 = vset.pattern.permute.xlu0 0
      %206 = vperm.xlu0 %205, %v200
      %v207 = vpop.permute.xlu0 %206
      %210 = vset.pattern.permute.xlu0 0
      %211 = vperm.xlu0 %210, %v201
      %v212 = vpop.permute.xlu0 %211
      %215 = vset.pattern.permute.xlu0 0
      %216 = vperm.xlu0 %215, %v202
      %v217 = vpop.permute.xlu0 %216
      %220 = vset.pattern.permute.xlu0 0
      %221 = vperm.xlu0 %220, %v203
      %v222 = vpop.permute.xlu0 %221
      %v224 = vmul.f32 %v196, %v207
      %v225 = vmul.f32 %v197, %v212
      %v226 = vmul.f32 %v198, %v217
      %v227 = vmul.f32 %v199, %v222
      %v228 = vpack.c.bf16 %v225, %v224
      %v229 = vpack.c.bf16 %v227, %v226
      %v230 = vld [vmem:[#allocation6] sm:$0xf]
      %v231 = vld [vmem:[#allocation6 + $0x4] sm:$0xf]
      %v232 = vld [vmem:[#allocation6 + $0x8] sm:$0xf]
      %v233 = vld [vmem:[#allocation6 + $0xc] sm:$0xf]
      %v234 = vld [vmem:[#allocation6 + $0x10] sm:$0xf]
      %v235 = vld [vmem:[#allocation6 + $0x14] sm:$0xf]
      %v236 = vld [vmem:[#allocation6 + $0x18] sm:$0xf]
      %v237 = vld [vmem:[#allocation6 + $0x1c] sm:$0xf]
      %v238 = vld [vmem:[#allocation6 + $0x20] sm:$0xf]
      %v239 = vld [vmem:[#allocation6 + $0x24] sm:$0xf]
      %v240 = vld [vmem:[#allocation6 + $0x28] sm:$0xf]
      %v241 = vld [vmem:[#allocation6 + $0x2c] sm:$0xf]
      %v242 = vld [vmem:[#allocation6 + $0x30] sm:$0xf]
      %v243 = vld [vmem:[#allocation6 + $0x34] sm:$0xf]
      %v244 = vld [vmem:[#allocation6 + $0x38] sm:$0xf]
      %v245 = vld [vmem:[#allocation6 + $0x3c] sm:$0xf]
      %v246 = vld [vmem:[%s3] sm:$0xf]
      %v247 = vld [vmem:[%s3 + $0x4] sm:$0xf]
      %v248 = vld [vmem:[%s3 + $0x8] sm:$0xf]
      %v249 = vld [vmem:[%s3 + $0xc] sm:$0xf]
      %v250 = vld [vmem:[#allocation8] sm:$0xf]
      %v251 = vld [vmem:[#allocation8 + $0x4] sm:$0xf]
      %v252 = vld [vmem:[#allocation8 + $0x8] sm:$0xf]
      %v253 = vld [vmem:[#allocation8 + $0xc] sm:$0xf]
      %v254 = vld [vmem:[#allocation8 + $0x10] sm:$0xf]
      %v255 = vld [vmem:[#allocation8 + $0x14] sm:$0xf]
      %v256 = vld [vmem:[#allocation8 + $0x18] sm:$0xf]
      %v257 = vld [vmem:[#allocation8 + $0x1c] sm:$0xf]
      %v258 = vld [vmem:[#allocation8 + $0x20] sm:$0xf]
      %v259 = vld [vmem:[#allocation8 + $0x24] sm:$0xf]
      %v260 = vld [vmem:[#allocation8 + $0x28] sm:$0xf]
      %v261 = vld [vmem:[#allocation8 + $0x2c] sm:$0xf]
      %v262 = vld [vmem:[#allocation8 + $0x30] sm:$0xf]
      %v263 = vld [vmem:[#allocation8 + $0x34] sm:$0xf]
      %v264 = vld [vmem:[#allocation8 + $0x38] sm:$0xf]
      %v265 = vld [vmem:[#allocation8 + $0x3c] sm:$0xf]
      %v270 = vunpack.c.l.b16 %v246
      %v271 = vunpack.c.l.b16 %v247
      %v272 = vunpack.c.l.b16 %v248
      %v273 = vunpack.c.l.b16 %v249
      %v274 = vpack.c.b16 %v271, %v270
      %v275 = vpack.c.b16 %v273, %v272
      %v294 = vunpack.c.l.b16 %v250
      %v295 = vunpack.c.l.b16 %v251
      %v296 = vunpack.c.l.b16 %v252
      %v297 = vunpack.c.l.b16 %v253
      %v298 = vunpack.c.l.b16 %v254
      %v299 = vunpack.c.l.b16 %v255
      %v300 = vunpack.c.l.b16 %v256
      %v301 = vunpack.c.l.b16 %v257
      %v302 = vunpack.c.l.b16 %v258
      %v303 = vunpack.c.l.b16 %v259
      %v304 = vunpack.c.l.b16 %v260
      %v305 = vunpack.c.l.b16 %v261
      %v306 = vunpack.c.l.b16 %v262
      %v307 = vunpack.c.l.b16 %v263
      %v308 = vunpack.c.l.b16 %v264
      %v309 = vunpack.c.l.b16 %v265
      %v310 = vpack.c.b16 %v295, %v294
      %v311 = vpack.c.b16 %v297, %v296
      %v312 = vpack.c.b16 %v299, %v298
      %v313 = vpack.c.b16 %v301, %v300
      %v314 = vpack.c.b16 %v303, %v302
      %v315 = vpack.c.b16 %v305, %v304
      %v316 = vpack.c.b16 %v307, %v306
      %v317 = vpack.c.b16 %v309, %v308
      %326 = vmatpush.bf16.msra.mxu0 %v317
      %327 = vmatpush.bf16.msra.mxu0 %v316
      %328 = vmatpush.bf16.msra.mxu0 %v315
      %329 = vmatpush.bf16.msra.mxu0 %v314
      %330 = vmatpush.bf16.msra.mxu0 %v313
      %331 = vmatpush.bf16.msra.mxu0 %v312
      %332 = vmatpush.bf16.msra.mxu0 %v311
      %333 = vmatpush.bf16.msra.mxu0 %v310
      %334 = vmatmul.bf16.gmra.mxu0 %v274
      %v335 = vpop.f32.mrf.mxu0
      %v336 = vadd.f32 0.0, %v335
      %v337 = vpop.f32.mrf.mxu0
      %v338 = vadd.f32 0.0, %v337
      %339 = vmatmul.bf16.gmra.mxu0 %v275
      %v340 = vpop.f32.mrf.mxu0
      %v341 = vadd.f32 0.0, %v340
      %v342 = vpop.f32.mrf.mxu0
      %v343 = vadd.f32 0.0, %v342
      %344 = vdwg.mxu0
      %v361 = vunpack.c.l.b16 %v230
      %v362 = vunpack.c.l.b16 %v231
      %v363 = vunpack.c.l.b16 %v232
      %v364 = vunpack.c.l.b16 %v233
      %v365 = vunpack.c.l.b16 %v234
      %v366 = vunpack.c.l.b16 %v235
      %v367 = vunpack.c.l.b16 %v236
      %v368 = vunpack.c.l.b16 %v237
      %v369 = vunpack.c.l.b16 %v238
      %v370 = vunpack.c.l.b16 %v239
      %v371 = vunpack.c.l.b16 %v240
      %v372 = vunpack.c.l.b16 %v241
      %v373 = vunpack.c.l.b16 %v242
      %v374 = vunpack.c.l.b16 %v243
      %v375 = vunpack.c.l.b16 %v244
      %v376 = vunpack.c.l.b16 %v245
      %v377 = vpack.c.b16 %v362, %v361
      %v378 = vpack.c.b16 %v364, %v363
      %v379 = vpack.c.b16 %v366, %v365
      %v380 = vpack.c.b16 %v368, %v367
      %v381 = vpack.c.b16 %v370, %v369
      %v382 = vpack.c.b16 %v372, %v371
      %v383 = vpack.c.b16 %v374, %v373
      %v384 = vpack.c.b16 %v376, %v375
      %393 = vmatpush.bf16.msra.mxu0 %v384
      %394 = vmatpush.bf16.msra.mxu0 %v383
      %395 = vmatpush.bf16.msra.mxu0 %v382
      %396 = vmatpush.bf16.msra.mxu0 %v381
      %397 = vmatpush.bf16.msra.mxu0 %v380
      %398 = vmatpush.bf16.msra.mxu0 %v379
      %399 = vmatpush.bf16.msra.mxu0 %v378
      %400 = vmatpush.bf16.msra.mxu0 %v377
      %401 = vmatmul.bf16.gmra.mxu0 %v228
      %v402 = vpop.f32.mrf.mxu0
      %v403 = vadd.f32 %v336, %v402
      %v404 = vpop.f32.mrf.mxu0
      %v405 = vadd.f32 %v338, %v404
      %406 = vmatmul.bf16.gmra.mxu0 %v229
      %v407 = vpop.f32.mrf.mxu0
      %v408 = vadd.f32 %v341, %v407
      %v409 = vpop.f32.mrf.mxu0
      %v410 = vadd.f32 %v343, %v409
      %411 = vdwg.mxu0
      %v412 = vld [vmem:[%s6] sm:$0x1]
      %v414 = vperm.slane %v412, 0
      %v416 = vadd.f32 %v403, %v414
      %v417 = vadd.f32 %v405, %v414
      %v418 = vadd.f32 %v408, %v414
      %v419 = vadd.f32 %v410, %v414
      %v420 = vmax.f32 %v416, 0.0
      %v421 = vmax.f32 %v417, 0.0
      %v422 = vmax.f32 %v418, 0.0
      %v423 = vmax.f32 %v419, 0.0
      %v424 = vpack.c.bf16 %v420, %v420
      %v425 = vpack.c.bf16 %v421, %v421
      %v426 = vpack.c.bf16 %v422, %v422
      %v427 = vpack.c.bf16 %v423, %v423
      %428 = vst [vmem:[#allocation9] sm:$0xf] %v424
      %429 = vst [vmem:[#allocation9 + $0x4] sm:$0xf] %v425
      %430 = vst [vmem:[#allocation9 + $0x8] sm:$0xf] %v426
      %431 = vst [vmem:[#allocation9 + $0xc] sm:$0xf] %v427
    $region49: #{tpu_custom_call.1} parent=1 // pred_fallthru
      _
    // Predicated region
    $region50: #{tpu_custom_call.1} parent=1 // pred_check
      _
    $region51: #{tpu_custom_call.1} parent=1 // pred_check_branch
      %433 = sbr.rel (0) target = $region53
    $region52: #{tpu_custom_call.1} parent=1 // pred_region
      %435 = vsyncadd [#allocation5], 0
      %s436 = sshll.u32 [#allocation9], 4
      %s437 = int_to_ptr.vmem [resolvable:$true] %s436
      %s438 = sshll.u32 %s7, 4
      %s439 = int_to_ptr.hbm [resolvable:$true] %s438
      %444 = dma.vmem_to_hbm [thread:$0]  %s437, 256, %s439, [#allocation5], 64, 64, 4
    $region53: #{tpu_custom_call.1} parent=1 // pred_fallthru
      _
    // Predicated region
    $region54: #{tpu_custom_call.1} parent=1 // pred_check
      _
    $region55: #{tpu_custom_call.1} parent=1 // pred_check_branch
      %446 = sbr.rel (0) target = $region57
    $region56: #{tpu_custom_call.1} parent=1 // pred_region
      %448 = dma.done [#allocation5], 256
    $region57: #{tpu_custom_call.1} parent=1 // pred_fallthru
      _
    %449 = vsyncpa [#allocation4], 1
    %450 = vsyncpa [#allocation7], 1
    %451 = vsyncpa [#allocation5], 1

</llo_original>
